<compile_context>
chip_gen: v5e
topology: v5e:2x2
jax: 0.10.0
libtpu: 0.0.40
codegen_flags: <defaults>
</compile_context>

<pallas_src>
import functools

import jax
import jax.numpy as jnp
from jax.experimental import pallas as pl
from jax.experimental.pallas import tpu as pltpu


_LANE = 128
_MIB = 1024 * 1024


def _tile_candidates(total, cap):
    """Multiples of 128 that divide `total`, descending, capped at `cap`."""
    cap = max(_LANE, (min(cap, total) // _LANE) * _LANE)
    return [t for t in range(cap, _LANE - 1, -_LANE) if total % t == 0]


def _select_tiles(D, M, itemsize, *, target_a_bytes=2 * _MIB,
                  tile_m_cap=1024, tile_k_cap=4096):
    """Pick (tile_m, tile_k) so the streamed A tile is DMA-amortized.

    The per-step A block is (tile_k, tile_m); with small N this kernel is a
    pure HBM stream of A, so we budget on tile_k * tile_m * itemsize rather
    than each dim independently.  The M axis is only split into >= 2 tiles
    (v7x megacore) when tile_k can grow enough to keep each per-TC step above
    the byte target.
    """
    m_cands = _tile_candidates(M, tile_m_cap)   # descending
    k_cands = _tile_candidates(D, tile_k_cap)   # descending

    def pick_k(tm):
        # Smallest tile_k whose A tile meets the byte target; else the largest
        # available (D itself is too small to reach the target).
        for tk in reversed(k_cands):            # ascending
            if tk * tm * itemsize >= target_a_bytes:
                return tk
        return k_cands[0]

    tile_m = m_cands[0]                         # largest lane-dense M tile
    tile_k = pick_k(tile_m)

    # Prefer >= 2 M tiles (megacore) only if the per-step A tile still
    # amortizes the ~0.35 us step overhead after growing tile_k.
    if M // tile_m < 2:
        for tm in m_cands[1:]:
            tk = pick_k(tm)
            if tk * tm * itemsize >= target_a_bytes:
                tile_m, tile_k = tm, tk
                break

    return tile_m, tile_k


def _matmul_kernel(x_ref, a_ref, o_ref):
    """Noiseless path: accumulate x_k @ A_kj directly into the f32 output
    block (resident across the K reduction axis)."""
    k = pl.program_id(1)
    part = jnp.dot(x_ref[...], a_ref[...], preferred_element_type=jnp.float32)

    @pl.when(k == 0)
    def _init():
        o_ref[...] = part

    @pl.when(k > 0)
    def _accum():
        o_ref[...] += part


def _matmul_noise_kernel(x_ref, a_ref, noise_ref, o_ref, *, noise_sigma):
    """Noisy path: same accumulation, plus fused sigma * noise in the epilogue."""
    k = pl.program_id(1)
    part = jnp.dot(x_ref[...], a_ref[...], preferred_element_type=jnp.float32)

    @pl.when(k == 0)
    def _init():
        o_ref[...] = part

    @pl.when(k > 0)
    def _accum():
        o_ref[...] += part

    @pl.when(k == pl.num_programs(1) - 1)
    def _add_noise():
        o_ref[...] += jnp.float32(noise_sigma) * noise_ref[...].astype(jnp.float32)


def operator_plus_noise(x_nchw, A, noise_sigma, key=None, *, tile_m=None, tile_k=None):
    """Pallas implementation of OperatorPlusNoise.forward.

    x_nchw: (N, C, H, W) input image batch.
    A:      (D, M) operator weights, D = C*H*W.  Used in its STORED dtype --
            store it in bf16 (cast once, outside this call) for the 2x HBM
            bandwidth win; do NOT cast per call.
    Returns (N, M) float32 = x_flat @ A + noise_sigma * N(0, 1).
    """
    N, C, H, W = x_nchw.shape
    D = C * H * W
    Dk, M = A.shape
    assert Dk == D, (Dk, D)
    assert M % _LANE == 0 and D % _LANE == 0

    has_noise = float(noise_sigma) != 0.0
    if has_noise and key is None:
        # torch.randn_like draws fresh samples each call; silently reusing
        # PRNGKey(0) would not.  Force the caller to manage (and split) keys.
        raise ValueError("noise_sigma != 0 requires an explicit PRNG `key`.")

    item = jnp.dtype(A.dtype).itemsize
    if tile_m is None or tile_k is None:
        auto_m, auto_k = _select_tiles(D, M, item)
        tile_m = auto_m if tile_m is None else tile_m
        tile_k = auto_k if tile_k is None else tile_k
    assert M % tile_m == 0 and D % tile_k == 0

    # x is tiny (N*D elements); casting it to A's compute dtype is negligible.
    x_flat = x_nchw.reshape(N, D).astype(A.dtype)

    # TODO(synk): if N ever grows to many MB, hold the full (N, D) x slab
    # resident (index_map (0, 0) + pl.ds slicing) instead of re-streaming the
    # (N, tile_k) row block for every M tile.  Irrelevant at N ~ 2.
    in_specs = [
        pl.BlockSpec((N, tile_k), lambda j, k: (0, k)),       # x row slab
        pl.BlockSpec((tile_k, tile_m), lambda j, k: (k, j)),  # A tile (streamed)
    ]
    args = [x_flat, A]

    if has_noise:
        noise = jax.random.normal(key, (N, M), dtype=jnp.float32)
        in_specs.append(pl.BlockSpec((N, tile_m), lambda j, k: (0, j)))
        args.append(noise)
        kernel = functools.partial(_matmul_noise_kernel, noise_sigma=float(noise_sigma))
    else:
        kernel = _matmul_kernel

    # Generation-aware VMEM budget: v7x has 64 MiB/TC physical (leave
    # headroom -> 56 MiB cap); v5e/v6e have 128 MiB (-> 100 MiB cap).  Floor
    # at 32 MiB so v5e's 16 MiB scoped default never rejects the tiles.
    dev_kind = jax.devices()[0].device_kind.lower()
    vmem_cap = (56 if "7" in dev_kind else 100) * _MIB
    vmem_need = (
        2 * tile_k * tile_m * item            # double-buffered A tile
        + 2 * N * tile_k * item               # double-buffered x slab
        + 2 * N * tile_m * 4                  # output block (f32)
        + (2 * N * tile_m * 4 if has_noise else 0)
    )
    vmem_limit = min(max(2 * vmem_need, 32 * _MIB), vmem_cap)

    bytes_accessed = (
        D * M * item + N * D * item + N * M * 4 + (N * M * 4 if has_noise else 0)
    )
    cost = pl.CostEstimate(
        flops=2 * N * D * M, transcendentals=0, bytes_accessed=bytes_accessed
    )

    grid_spec = pltpu.PrefetchScalarGridSpec(
        num_scalar_prefetch=0,
        grid=(M // tile_m, D // tile_k),          # reduction (K) axis last
        in_specs=in_specs,
        out_specs=pl.BlockSpec((N, tile_m), lambda j, k: (0, j)),
    )

    return pl.pallas_call(
        kernel,
        out_shape=jax.ShapeDtypeStruct((N, M), jnp.float32),
        grid_spec=grid_spec,
        compiler_params=pltpu.CompilerParams(
            dimension_semantics=("parallel", "arbitrary"),
            vmem_limit_bytes=vmem_limit,
        ),
        cost_estimate=cost,
    )(*args)


# TODO(synk): the module's adjoint() delegates to the internal operator's
# adjoint (x @ A.T here); only forward() is implemented as a kernel.


if __name__ == "__main__":
    key = jax.random.PRNGKey(0)
    kx, kA, kn = jax.random.split(key, 3)

    # Small shapes consistent with an image-domain operator input.
    N, C, H, W = 2, 4, 16, 16
    D = C * H * W          # 1024
    M = 256                # number of "measurements"
    noise_sigma = 0.1

    x = jax.random.normal(kx, (N, C, H, W), dtype=jnp.float32)
    A_f32 = jax.random.normal(kA, (D, M), dtype=jnp.float32) / jnp.sqrt(jnp.float32(D))
    # Cast the operator weights to bf16 ONCE (this is the stored form reused
    # across calls) -- never inside the per-call wrapper.
    A = A_f32.astype(jnp.bfloat16)

    # Reference: same bf16 inputs, f32 accumulation (matches the MXU path).
    x_flat = x.reshape(N, D).astype(jnp.bfloat16)
    ref = jnp.dot(x_flat, A, preferred_element_type=jnp.float32)

    # 1) Noiseless, auto tiles (demo collapses to a single DMA-amortized step).
    out_clean = operator_plus_noise(x, A, noise_sigma=0.0)
    out_clean = jax.block_until_ready(out_clean)
    assert out_clean.shape == (N, M)
    assert jnp.allclose(out_clean, ref, atol=2e-3, rtol=2e-3)

    # 2) Noiseless, forced small tiles: exercises the K-accumulation branch
    #    (4 K steps) and multiple M tiles (2) feeding the same code path used
    #    at realistic image-scale D.
    out_tiled = operator_plus_noise(x, A, noise_sigma=0.0, tile_m=128, tile_k=256)
    out_tiled = jax.block_until_ready(out_tiled)
    assert jnp.allclose(out_tiled, ref, atol=2e-3, rtol=2e-3)

    # 3) Full forward: A(x) + sigma * randn_like, fused noise epilogue.
    out = operator_plus_noise(x, A, noise_sigma=noise_sigma, key=kn)
    out = jax.block_until_ready(out)
    assert out.shape == (N, M)
    err = out - ref
    # Noise should be roughly zero-mean with std ~ noise_sigma (loose check).
    assert jnp.abs(jnp.mean(err)) < 5.0 * noise_sigma
    assert 0.3 * noise_sigma < jnp.std(err) < 3.0 * noise_sigma

    print("KERNEL_OK")
</pallas_src>

<mosaic_0001>
module attributes {stable_mosaic.version = 11 : i64} {
  func.func @_matmul_kernel(%arg0: i32, %arg1: i32, %arg2: memref<2x1024xbf16, #tpu.memory_space<vmem>>, %arg3: memref<1024x256xbf16, #tpu.memory_space<vmem>>, %arg4: memref<2x256xf32, #tpu.memory_space<vmem>>) attributes {dimension_semantics = [#tpu.dimension_semantics<parallel>, #tpu.dimension_semantics<arbitrary>], iteration_bounds = array<i64: 1, 1>, scalar_prefetch = 0 : i64, scratch_operands = 0 : i64, tpu.core_type = #tpu.core_type<tc>, window_params = [{transform_indices = @transform_0, window_bounds = array<i64: 2, 1024>}, {transform_indices = @transform_1, window_bounds = array<i64: 1024, 256>}, {transform_indices = @transform_2, window_bounds = array<i64: 2, 256>}]} {
    %c0 = arith.constant 0 : index
    %c0_0 = arith.constant 0 : index
    %0 = vector.load %arg2[%c0, %c0_0] : memref<2x1024xbf16, #tpu.memory_space<vmem>>, vector<2x1024xbf16>
    %c0_1 = arith.constant 0 : index
    %c0_2 = arith.constant 0 : index
    %1 = vector.load %arg3[%c0_1, %c0_2] : memref<1024x256xbf16, #tpu.memory_space<vmem>>, vector<1024x256xbf16>
    %cst = arith.constant dense<0.000000e+00> : vector<2x256xf32>
    %2 = tpu.matmul %0, %1, %cst {dimension_numbers = #tpu.dot_dimension_numbers<[1], [0], [0], [1], [0, 0, 1, 1], [], []>} : vector<2x1024xbf16>, vector<1024x256xbf16>, vector<2x256xf32> -> vector<2x256xf32>
    %c0_i32 = arith.constant 0 : i32
    %3 = arith.cmpi eq, %arg1, %c0_i32 : i32
    %4 = arith.extui %3 : i1 to i32
    %c0_i32_3 = arith.constant 0 : i32
    %5 = arith.cmpi ne, %4, %c0_i32_3 : i32
    scf.if %5 {
      %c0_6 = arith.constant 0 : index
      %c0_7 = arith.constant 0 : index
      %9 = vector.load %arg4[%c0_6, %c0_7] : memref<2x256xf32, #tpu.memory_space<vmem>>, vector<2x256xf32>
      tpu.vector_store %arg4[%c0_6, %c0_7], %2 {strides = array<i32>} : memref<2x256xf32, #tpu.memory_space<vmem>>, vector<2x256xf32>,
    } else {
    }
    %c0_i32_4 = arith.constant 0 : i32
    %6 = arith.cmpi sgt, %arg1, %c0_i32_4 : i32
    %7 = arith.extui %6 : i1 to i32
    %c0_i32_5 = arith.constant 0 : i32
    %8 = arith.cmpi ne, %7, %c0_i32_5 : i32
    scf.if %8 {
      %c0_6 = arith.constant 0 : index
      %c0_7 = arith.constant 0 : index
      %9 = vector.load %arg4[%c0_6, %c0_7] : memref<2x256xf32, #tpu.memory_space<vmem>>, vector<2x256xf32>
      %10 = arith.addf %9, %2 : vector<2x256xf32>
      %c0_8 = arith.constant 0 : index
      %c0_9 = arith.constant 0 : index
      %11 = vector.load %arg4[%c0_8, %c0_9] : memref<2x256xf32, #tpu.memory_space<vmem>>, vector<2x256xf32>
      tpu.vector_store %arg4[%c0_8, %c0_9], %10 {strides = array<i32>} : memref<2x256xf32, #tpu.memory_space<vmem>>, vector<2x256xf32>,
    } else {
    }
    return
  }
  func.func @transform_0(%arg0: i32, %arg1: i32) -> (i32, i32) {
    %c0_i32 = arith.constant 0 : i32
    %c0_i32_0 = arith.constant 0 : i32
    return %c0_i32, %arg1 : i32, i32
  }
  func.func @transform_1(%arg0: i32, %arg1: i32) -> (i32, i32) {
    %c0_i32 = arith.constant 0 : i32
    return %arg1, %arg0 : i32, i32
  }
  func.func @transform_2(%arg0: i32, %arg1: i32) -> (i32, i32) {
    %c0_i32 = arith.constant 0 : i32
    %c0_i32_0 = arith.constant 0 : i32
    return %c0_i32, %arg0 : i32, i32
  }
}

</mosaic_0001>

<llo_original>
// kernel: tpu_custom_call.1
$region0: #{tpu_custom_call.1}
  #allocation0 [shape = 'u32[]', space=smem, size = 0x4, offset = 0x4, fixed_abs, tag = 'smem constant byte address 0x4 - core index']
  #allocation1 [shape = 'u32[72,128]{1,0:T(1,128)}', space=vmem, size = 0x9000, scoped, tag = 'internal scratch']
  %s0 = inlined_call_operand.hbm [shape: bf16[2,1024], index: 0, kind: input, shape index: {}]
  %s1 = inlined_call_operand.hbm [shape: bf16[1024,256], index: 1, kind: input, shape index: {}]
  %s2 = inlined_call_operand.hbm [shape: f32[2,256], index: 2, kind: output, shape index: {}]
  %s3 = sld [smem:[#allocation0]]
  $region34: #{tpu_custom_call.1} parent=0
    _
  %s5 = ssub.s32 1, %s3
  %s6 = scalar_select 0, %s5, %s3
  $region1: #{tpu_custom_call.1} parent=0
    #allocation2 [shape = 'u8[4096]{0}', space=vmem, size = 0x1000, scoped, tag = 'input window, operand 0, single buffered']
    #allocation3 [shape = 's32[1]{0}', space=sflag, size = 0x4, scoped, tag = 'scoped memory for tpu_custom_call.1']
    #allocation4 [shape = 's32[1]{0}', space=sflag, size = 0x4, scoped, tag = 'scoped memory for tpu_custom_call.1']
    #allocation5 [shape = 'u8[524288]{0}', space=vmem, size = 0x80000, scoped, tag = 'input window, operand 1, single buffered']
    #allocation6 [shape = 's32[1]{0}', space=sflag, size = 0x4, scoped, tag = 'scoped memory for tpu_custom_call.1']
    #allocation7 [shape = 'u8[2048]{0}', space=vmem, size = 0x800, scoped, tag = 'output window, operand 0, single buffered']
    %7 = vsyncpa [#allocation3], 0
    %8 = vsyncpa [#allocation6], 0
    %9 = vsyncpa [#allocation4], 0
    // Predicated region
    $region2: #{tpu_custom_call.1} parent=1 // pred_check
      _
    $region3: #{tpu_custom_call.1} parent=1 // pred_check_branch
      %11 = sbr.rel (0) target = $region5
    $region4: #{tpu_custom_call.1} parent=1 // pred_region
      %13 = vsyncadd [#allocation3], 0
      %s15 = sshll.u32 %s0, 4
      %s16 = int_to_ptr.hbm [resolvable:$true] %s15
      %s17 = sshll.u32 [#allocation2], 4
      %s18 = int_to_ptr.vmem [resolvable:$true] %s17
      %20 = dma.hbm_to_vmem [thread:$0]  %s16, 128, %s18, [#allocation3]
    $region5: #{tpu_custom_call.1} parent=1 // pred_fallthru
      _
    // Predicated region
    $region6: #{tpu_custom_call.1} parent=1 // pred_check
      _
    $region7: #{tpu_custom_call.1} parent=1 // pred_check_branch
      %22 = sbr.rel (0) target = $region9
    $region8: #{tpu_custom_call.1} parent=1 // pred_region
      %24 = vsyncadd [#allocation6], 0
      %s25 = sshll.u32 %s1, 4
      %s26 = int_to_ptr.hbm [resolvable:$true] %s25
      %s27 = sshll.u32 [#allocation5], 4
      %s28 = int_to_ptr.vmem [resolvable:$true] %s27
      %33 = dma.hbm_to_vmem [thread:$0]  %s26, 16384, %s28, [#allocation6], 128, 128, 8
    $region9: #{tpu_custom_call.1} parent=1 // pred_fallthru
      _
    // Predicated region
    $region10: #{tpu_custom_call.1} parent=1 // pred_check
      _
    $region11: #{tpu_custom_call.1} parent=1 // pred_check_branch
      %35 = sbr.rel (0) target = $region13
    $region12: #{tpu_custom_call.1} parent=1 // pred_region
      %37 = dma.done [#allocation3], 128
    $region13: #{tpu_custom_call.1} parent=1 // pred_fallthru
      _
    // Predicated region
    $region14: #{tpu_custom_call.1} parent=1 // pred_check
      _
    $region15: #{tpu_custom_call.1} parent=1 // pred_check_branch
      %39 = sbr.rel (0) target = $region17
    $region16: #{tpu_custom_call.1} parent=1 // pred_region
      %41 = dma.done [#allocation6], 16384
    $region17: #{tpu_custom_call.1} parent=1 // pred_fallthru
      _
    %v42 = vld [vmem:[#allocation2] sm:$0xff]
    %v43 = vld [vmem:[#allocation5] sm:$0xff]
    %v44 = vld [vmem:[#allocation5 + $0x8] sm:$0xff]
    %v45 = vld [vmem:[#allocation5 + $0x10] sm:$0xff]
    %v46 = vld [vmem:[#allocation5 + $0x18] sm:$0xff]
    %v47 = vld [vmem:[#allocation5 + $0x20] sm:$0xff]
    %v48 = vld [vmem:[#allocation5 + $0x28] sm:$0xff]
    %v49 = vld [vmem:[#allocation5 + $0x30] sm:$0xff]
    %v50 = vld [vmem:[#allocation5 + $0x38] sm:$0xff]
    %v51 = vld [vmem:[#allocation5 + $0x40] sm:$0xff]
    %v52 = vld [vmem:[#allocation5 + $0x48] sm:$0xff]
    %v53 = vld [vmem:[#allocation5 + $0x50] sm:$0xff]
    %v54 = vld [vmem:[#allocation5 + $0x58] sm:$0xff]
    %v55 = vld [vmem:[#allocation5 + $0x60] sm:$0xff]
    %v56 = vld [vmem:[#allocation5 + $0x68] sm:$0xff]
    %v57 = vld [vmem:[#allocation5 + $0x70] sm:$0xff]
    %v58 = vld [vmem:[#allocation5 + $0x78] sm:$0xff]
    %v59 = vld [vmem:[#allocation5 + $0x80] sm:$0xff]
    %v60 = vld [vmem:[#allocation5 + $0x88] sm:$0xff]
    %v61 = vld [vmem:[#allocation5 + $0x90] sm:$0xff]
    %v62 = vld [vmem:[#allocation5 + $0x98] sm:$0xff]
    %v63 = vld [vmem:[#allocation5 + $0xa0] sm:$0xff]
    %v64 = vld [vmem:[#allocation5 + $0xa8] sm:$0xff]
    %v65 = vld [vmem:[#allocation5 + $0xb0] sm:$0xff]
    %v66 = vld [vmem:[#allocation5 + $0xb8] sm:$0xff]
    %v67 = vld [vmem:[#allocation5 + $0xc0] sm:$0xff]
    %v68 = vld [vmem:[#allocation5 + $0xc8] sm:$0xff]
    %v69 = vld [vmem:[#allocation5 + $0xd0] sm:$0xff]
    %v70 = vld [vmem:[#allocation5 + $0xd8] sm:$0xff]
    %v71 = vld [vmem:[#allocation5 + $0xe0] sm:$0xff]
    %v72 = vld [vmem:[#allocation5 + $0xe8] sm:$0xff]
    %v73 = vld [vmem:[#allocation5 + $0xf0] sm:$0xff]
    %v74 = vld [vmem:[#allocation5 + $0xf8] sm:$0xff]
    %v75 = vld [vmem:[#allocation5 + $0x100] sm:$0xff]
    %v76 = vld [vmem:[#allocation5 + $0x108] sm:$0xff]
    %v77 = vld [vmem:[#allocation5 + $0x110] sm:$0xff]
    %v78 = vld [vmem:[#allocation5 + $0x118] sm:$0xff]
    %v79 = vld [vmem:[#allocation5 + $0x120] sm:$0xff]
    %v80 = vld [vmem:[#allocation5 + $0x128] sm:$0xff]
    %v81 = vld [vmem:[#allocation5 + $0x130] sm:$0xff]
    %v82 = vld [vmem:[#allocation5 + $0x138] sm:$0xff]
    %v83 = vld [vmem:[#allocation5 + $0x140] sm:$0xff]
    %v84 = vld [vmem:[#allocation5 + $0x148] sm:$0xff]
    %v85 = vld [vmem:[#allocation5 + $0x150] sm:$0xff]
    %v86 = vld [vmem:[#allocation5 + $0x158] sm:$0xff]
    %v87 = vld [vmem:[#allocation5 + $0x160] sm:$0xff]
    %v88 = vld [vmem:[#allocation5 + $0x168] sm:$0xff]
    %v89 = vld [vmem:[#allocation5 + $0x170] sm:$0xff]
    %v90 = vld [vmem:[#allocation5 + $0x178] sm:$0xff]
    %v91 = vld [vmem:[#allocation5 + $0x180] sm:$0xff]
    %v92 = vld [vmem:[#allocation5 + $0x188] sm:$0xff]
    %v93 = vld [vmem:[#allocation5 + $0x190] sm:$0xff]
    %v94 = vld [vmem:[#allocation5 + $0x198] sm:$0xff]
    %v95 = vld [vmem:[#allocation5 + $0x1a0] sm:$0xff]
    %v96 = vld [vmem:[#allocation5 + $0x1a8] sm:$0xff]
    %v97 = vld [vmem:[#allocation5 + $0x1b0] sm:$0xff]
    %v98 = vld [vmem:[#allocation5 + $0x1b8] sm:$0xff]
    %v99 = vld [vmem:[#allocation5 + $0x1c0] sm:$0xff]
    %v100 = vld [vmem:[#allocation5 + $0x1c8] sm:$0xff]
    %v101 = vld [vmem:[#allocation5 + $0x1d0] sm:$0xff]
    %v102 = vld [vmem:[#allocation5 + $0x1d8] sm:$0xff]
    %v103 = vld [vmem:[#allocation5 + $0x1e0] sm:$0xff]
    %v104 = vld [vmem:[#allocation5 + $0x1e8] sm:$0xff]
    %v105 = vld [vmem:[#allocation5 + $0x1f0] sm:$0xff]
    %v106 = vld [vmem:[#allocation5 + $0x1f8] sm:$0xff]
    %v107 = vld [vmem:[#allocation5 + $0x200] sm:$0xff]
    %v108 = vld [vmem:[#allocation5 + $0x208] sm:$0xff]
    %v109 = vld [vmem:[#allocation5 + $0x210] sm:$0xff]
    %v110 = vld [vmem:[#allocation5 + $0x218] sm:$0xff]
    %v111 = vld [vmem:[#allocation5 + $0x220] sm:$0xff]
    %v112 = vld [vmem:[#allocation5 + $0x228] sm:$0xff]
    %v113 = vld [vmem:[#allocation5 + $0x230] sm:$0xff]
    %v114 = vld [vmem:[#allocation5 + $0x238] sm:$0xff]
    %v115 = vld [vmem:[#allocation5 + $0x240] sm:$0xff]
    %v116 = vld [vmem:[#allocation5 + $0x248] sm:$0xff]
    %v117 = vld [vmem:[#allocation5 + $0x250] sm:$0xff]
    %v118 = vld [vmem:[#allocation5 + $0x258] sm:$0xff]
    %v119 = vld [vmem:[#allocation5 + $0x260] sm:$0xff]
    %v120 = vld [vmem:[#allocation5 + $0x268] sm:$0xff]
    %v121 = vld [vmem:[#allocation5 + $0x270] sm:$0xff]
    %v122 = vld [vmem:[#allocation5 + $0x278] sm:$0xff]
    %v123 = vld [vmem:[#allocation5 + $0x280] sm:$0xff]
    %v124 = vld [vmem:[#allocation5 + $0x288] sm:$0xff]
    %v125 = vld [vmem:[#allocation5 + $0x290] sm:$0xff]
    %v126 = vld [vmem:[#allocation5 + $0x298] sm:$0xff]
    %v127 = vld [vmem:[#allocation5 + $0x2a0] sm:$0xff]
    %v128 = vld [vmem:[#allocation5 + $0x2a8] sm:$0xff]
    %v129 = vld [vmem:[#allocation5 + $0x2b0] sm:$0xff]
    %v130 = vld [vmem:[#allocation5 + $0x2b8] sm:$0xff]
    %v131 = vld [vmem:[#allocation5 + $0x2c0] sm:$0xff]
    %v132 = vld [vmem:[#allocation5 + $0x2c8] sm:$0xff]
    %v133 = vld [vmem:[#allocation5 + $0x2d0] sm:$0xff]
    %v134 = vld [vmem:[#allocation5 + $0x2d8] sm:$0xff]
    %v135 = vld [vmem:[#allocation5 + $0x2e0] sm:$0xff]
    %v136 = vld [vmem:[#allocation5 + $0x2e8] sm:$0xff]
    %v137 = vld [vmem:[#allocation5 + $0x2f0] sm:$0xff]
    %v138 = vld [vmem:[#allocation5 + $0x2f8] sm:$0xff]
    %v139 = vld [vmem:[#allocation5 + $0x300] sm:$0xff]
    %v140 = vld [vmem:[#allocation5 + $0x308] sm:$0xff]
    %v141 = vld [vmem:[#allocation5 + $0x310] sm:$0xff]
    %v142 = vld [vmem:[#allocation5 + $0x318] sm:$0xff]
    %v143 = vld [vmem:[#allocation5 + $0x320] sm:$0xff]
    %v144 = vld [vmem:[#allocation5 + $0x328] sm:$0xff]
    %v145 = vld [vmem:[#allocation5 + $0x330] sm:$0xff]
    %v146 = vld [vmem:[#allocation5 + $0x338] sm:$0xff]
    %v147 = vld [vmem:[#allocation5 + $0x340] sm:$0xff]
    %v148 = vld [vmem:[#allocation5 + $0x348] sm:$0xff]
    %v149 = vld [vmem:[#allocation5 + $0x350] sm:$0xff]
    %v150 = vld [vmem:[#allocation5 + $0x358] sm:$0xff]
    %v151 = vld [vmem:[#allocation5 + $0x360] sm:$0xff]
    %v152 = vld [vmem:[#allocation5 + $0x368] sm:$0xff]
    %v153 = vld [vmem:[#allocation5 + $0x370] sm:$0xff]
    %v154 = vld [vmem:[#allocation5 + $0x378] sm:$0xff]
    %v155 = vld [vmem:[#allocation5 + $0x380] sm:$0xff]
    %v156 = vld [vmem:[#allocation5 + $0x388] sm:$0xff]
    %v157 = vld [vmem:[#allocation5 + $0x390] sm:$0xff]
    %v158 = vld [vmem:[#allocation5 + $0x398] sm:$0xff]
    %v159 = vld [vmem:[#allocation5 + $0x3a0] sm:$0xff]
    %v160 = vld [vmem:[#allocation5 + $0x3a8] sm:$0xff]
    %v161 = vld [vmem:[#allocation5 + $0x3b0] sm:$0xff]
    %v162 = vld [vmem:[#allocation5 + $0x3b8] sm:$0xff]
    %v163 = vld [vmem:[#allocation5 + $0x3c0] sm:$0xff]
    %v164 = vld [vmem:[#allocation5 + $0x3c8] sm:$0xff]
    %v165 = vld [vmem:[#allocation5 + $0x3d0] sm:$0xff]
    %v166 = vld [vmem:[#allocation5 + $0x3d8] sm:$0xff]
    %v167 = vld [vmem:[#allocation5 + $0x3e0] sm:$0xff]
    %v168 = vld [vmem:[#allocation5 + $0x3e8] sm:$0xff]
    %v169 = vld [vmem:[#allocation5 + $0x3f0] sm:$0xff]
    %v170 = vld [vmem:[#allocation5 + $0x3f8] sm:$0xff]
    %172 = vst [vmem:[#allocation1] ss:$9 sm:$0xff] %v42
    %v173 = vld [vmem:[#allocation1] sm:$0xff]
    %v174 = vld [vmem:[#allocation1 + $0x9] sm:$0xff]
    %v175 = vld [vmem:[#allocation1 + $0x12] sm:$0xff]
    %v176 = vld [vmem:[#allocation1 + $0x1b] sm:$0xff]
    %v177 = vld [vmem:[#allocation1 + $0x24] sm:$0xff]
    %v178 = vld [vmem:[#allocation1 + $0x2d] sm:$0xff]
    %v179 = vld [vmem:[#allocation1 + $0x36] sm:$0xff]
    %v180 = vld [vmem:[#allocation1 + $0x3f] sm:$0xff]
    %v317 = vunpack.c.l.b16 %v43
    %v318 = vunpack.c.h.b16 %v43
    %v319 = vunpack.c.l.b16 %v44
    %v320 = vunpack.c.h.b16 %v44
    %v321 = vunpack.c.l.b16 %v45
    %v322 = vunpack.c.h.b16 %v45
    %v323 = vunpack.c.l.b16 %v46
    %v324 = vunpack.c.h.b16 %v46
    %v325 = vunpack.c.l.b16 %v47
    %v326 = vunpack.c.h.b16 %v47
    %v327 = vunpack.c.l.b16 %v48
    %v328 = vunpack.c.h.b16 %v48
    %v329 = vunpack.c.l.b16 %v49
    %v330 = vunpack.c.h.b16 %v49
    %v331 = vunpack.c.l.b16 %v50
    %v332 = vunpack.c.h.b16 %v50
    %v333 = vunpack.c.l.b16 %v51
    %v334 = vunpack.c.h.b16 %v51
    %v335 = vunpack.c.l.b16 %v52
    %v336 = vunpack.c.h.b16 %v52
    %v337 = vunpack.c.l.b16 %v53
    %v338 = vunpack.c.h.b16 %v53
    %v339 = vunpack.c.l.b16 %v54
    %v340 = vunpack.c.h.b16 %v54
    %v341 = vunpack.c.l.b16 %v55
    %v342 = vunpack.c.h.b16 %v55
    %v343 = vunpack.c.l.b16 %v56
    %v344 = vunpack.c.h.b16 %v56
    %v345 = vunpack.c.l.b16 %v57
    %v346 = vunpack.c.h.b16 %v57
    %v347 = vunpack.c.l.b16 %v58
    %v348 = vunpack.c.h.b16 %v58
    %v349 = vunpack.c.l.b16 %v59
    %v350 = vunpack.c.h.b16 %v59
    %v351 = vunpack.c.l.b16 %v60
    %v352 = vunpack.c.h.b16 %v60
    %v353 = vunpack.c.l.b16 %v61
    %v354 = vunpack.c.h.b16 %v61
    %v355 = vunpack.c.l.b16 %v62
    %v356 = vunpack.c.h.b16 %v62
    %v357 = vunpack.c.l.b16 %v63
    %v358 = vunpack.c.h.b16 %v63
    %v359 = vunpack.c.l.b16 %v64
    %v360 = vunpack.c.h.b16 %v64
    %v361 = vunpack.c.l.b16 %v65
    %v362 = vunpack.c.h.b16 %v65
    %v363 = vunpack.c.l.b16 %v66
    %v364 = vunpack.c.h.b16 %v66
    %v365 = vunpack.c.l.b16 %v67
    %v366 = vunpack.c.h.b16 %v67
    %v367 = vunpack.c.l.b16 %v68
    %v368 = vunpack.c.h.b16 %v68
    %v369 = vunpack.c.l.b16 %v69
    %v370 = vunpack.c.h.b16 %v69
    %v371 = vunpack.c.l.b16 %v70
    %v372 = vunpack.c.h.b16 %v70
    %v373 = vunpack.c.l.b16 %v71
    %v374 = vunpack.c.h.b16 %v71
    %v375 = vunpack.c.l.b16 %v72
    %v376 = vunpack.c.h.b16 %v72
    %v377 = vunpack.c.l.b16 %v73
    %v378 = vunpack.c.h.b16 %v73
    %v379 = vunpack.c.l.b16 %v74
    %v380 = vunpack.c.h.b16 %v74
    %v381 = vunpack.c.l.b16 %v75
    %v382 = vunpack.c.h.b16 %v75
    %v383 = vunpack.c.l.b16 %v76
    %v384 = vunpack.c.h.b16 %v76
    %v385 = vunpack.c.l.b16 %v77
    %v386 = vunpack.c.h.b16 %v77
    %v387 = vunpack.c.l.b16 %v78
    %v388 = vunpack.c.h.b16 %v78
    %v389 = vunpack.c.l.b16 %v79
    %v390 = vunpack.c.h.b16 %v79
    %v391 = vunpack.c.l.b16 %v80
    %v392 = vunpack.c.h.b16 %v80
    %v393 = vunpack.c.l.b16 %v81
    %v394 = vunpack.c.h.b16 %v81
    %v395 = vunpack.c.l.b16 %v82
    %v396 = vunpack.c.h.b16 %v82
    %v397 = vunpack.c.l.b16 %v83
    %v398 = vunpack.c.h.b16 %v83
    %v399 = vunpack.c.l.b16 %v84
    %v400 = vunpack.c.h.b16 %v84
    %v401 = vunpack.c.l.b16 %v85
    %v402 = vunpack.c.h.b16 %v85
    %v403 = vunpack.c.l.b16 %v86
    %v404 = vunpack.c.h.b16 %v86
    %v405 = vunpack.c.l.b16 %v87
    %v406 = vunpack.c.h.b16 %v87
    %v407 = vunpack.c.l.b16 %v88
    %v408 = vunpack.c.h.b16 %v88
    %v409 = vunpack.c.l.b16 %v89
    %v410 = vunpack.c.h.b16 %v89
    %v411 = vunpack.c.l.b16 %v90
    %v412 = vunpack.c.h.b16 %v90
    %v413 = vunpack.c.l.b16 %v91
    %v414 = vunpack.c.h.b16 %v91
    %v415 = vunpack.c.l.b16 %v92
    %v416 = vunpack.c.h.b16 %v92
    %v417 = vunpack.c.l.b16 %v93
    %v418 = vunpack.c.h.b16 %v93
    %v419 = vunpack.c.l.b16 %v94
    %v420 = vunpack.c.h.b16 %v94
    %v421 = vunpack.c.l.b16 %v95
    %v422 = vunpack.c.h.b16 %v95
    %v423 = vunpack.c.l.b16 %v96
    %v424 = vunpack.c.h.b16 %v96
    %v425 = vunpack.c.l.b16 %v97
    %v426 = vunpack.c.h.b16 %v97
    %v427 = vunpack.c.l.b16 %v98
    %v428 = vunpack.c.h.b16 %v98
    %v429 = vunpack.c.l.b16 %v99
    %v430 = vunpack.c.h.b16 %v99
    %v431 = vunpack.c.l.b16 %v100
    %v432 = vunpack.c.h.b16 %v100
    %v433 = vunpack.c.l.b16 %v101
    %v434 = vunpack.c.h.b16 %v101
    %v435 = vunpack.c.l.b16 %v102
    %v436 = vunpack.c.h.b16 %v102
    %v437 = vunpack.c.l.b16 %v103
    %v438 = vunpack.c.h.b16 %v103
    %v439 = vunpack.c.l.b16 %v104
    %v440 = vunpack.c.h.b16 %v104
    %v441 = vunpack.c.l.b16 %v105
    %v442 = vunpack.c.h.b16 %v105
    %v443 = vunpack.c.l.b16 %v106
    %v444 = vunpack.c.h.b16 %v106
    %v445 = vunpack.c.l.b16 %v107
    %v446 = vunpack.c.h.b16 %v107
    %v447 = vunpack.c.l.b16 %v108
    %v448 = vunpack.c.h.b16 %v108
    %v449 = vunpack.c.l.b16 %v109
    %v450 = vunpack.c.h.b16 %v109
    %v451 = vunpack.c.l.b16 %v110
    %v452 = vunpack.c.h.b16 %v110
    %v453 = vunpack.c.l.b16 %v111
    %v454 = vunpack.c.h.b16 %v111
    %v455 = vunpack.c.l.b16 %v112
    %v456 = vunpack.c.h.b16 %v112
    %v457 = vunpack.c.l.b16 %v113
    %v458 = vunpack.c.h.b16 %v113
    %v459 = vunpack.c.l.b16 %v114
    %v460 = vunpack.c.h.b16 %v114
    %v461 = vunpack.c.l.b16 %v115
    %v462 = vunpack.c.h.b16 %v115
    %v463 = vunpack.c.l.b16 %v116
    %v464 = vunpack.c.h.b16 %v116
    %v465 = vunpack.c.l.b16 %v117
    %v466 = vunpack.c.h.b16 %v117
    %v467 = vunpack.c.l.b16 %v118
    %v468 = vunpack.c.h.b16 %v118
    %v469 = vunpack.c.l.b16 %v119
    %v470 = vunpack.c.h.b16 %v119
    %v471 = vunpack.c.l.b16 %v120
    %v472 = vunpack.c.h.b16 %v120
    %v473 = vunpack.c.l.b16 %v121
    %v474 = vunpack.c.h.b16 %v121
    %v475 = vunpack.c.l.b16 %v122
    %v476 = vunpack.c.h.b16 %v122
    %v477 = vunpack.c.l.b16 %v123
    %v478 = vunpack.c.h.b16 %v123
    %v479 = vunpack.c.l.b16 %v124
    %v480 = vunpack.c.h.b16 %v124
    %v481 = vunpack.c.l.b16 %v125
    %v482 = vunpack.c.h.b16 %v125
    %v483 = vunpack.c.l.b16 %v126
    %v484 = vunpack.c.h.b16 %v126
    %v485 = vunpack.c.l.b16 %v127
    %v486 = vunpack.c.h.b16 %v127
    %v487 = vunpack.c.l.b16 %v128
    %v488 = vunpack.c.h.b16 %v128
    %v489 = vunpack.c.l.b16 %v129
    %v490 = vunpack.c.h.b16 %v129
    %v491 = vunpack.c.l.b16 %v130
    %v492 = vunpack.c.h.b16 %v130
    %v493 = vunpack.c.l.b16 %v131
    %v494 = vunpack.c.h.b16 %v131
    %v495 = vunpack.c.l.b16 %v132
    %v496 = vunpack.c.h.b16 %v132
    %v497 = vunpack.c.l.b16 %v133
    %v498 = vunpack.c.h.b16 %v133
    %v499 = vunpack.c.l.b16 %v134
    %v500 = vunpack.c.h.b16 %v134
    %v501 = vunpack.c.l.b16 %v135
    %v502 = vunpack.c.h.b16 %v135
    %v503 = vunpack.c.l.b16 %v136
    %v504 = vunpack.c.h.b16 %v136
    %v505 = vunpack.c.l.b16 %v137
    %v506 = vunpack.c.h.b16 %v137
    %v507 = vunpack.c.l.b16 %v138
    %v508 = vunpack.c.h.b16 %v138
    %v509 = vunpack.c.l.b16 %v139
    %v510 = vunpack.c.h.b16 %v139
    %v511 = vunpack.c.l.b16 %v140
    %v512 = vunpack.c.h.b16 %v140
    %v513 = vunpack.c.l.b16 %v141
    %v514 = vunpack.c.h.b16 %v141
    %v515 = vunpack.c.l.b16 %v142
    %v516 = vunpack.c.h.b16 %v142
    %v517 = vunpack.c.l.b16 %v143
    %v518 = vunpack.c.h.b16 %v143
    %v519 = vunpack.c.l.b16 %v144
    %v520 = vunpack.c.h.b16 %v144
    %v521 = vunpack.c.l.b16 %v145
    %v522 = vunpack.c.h.b16 %v145
    %v523 = vunpack.c.l.b16 %v146
    %v524 = vunpack.c.h.b16 %v146
    %v525 = vunpack.c.l.b16 %v147
    %v526 = vunpack.c.h.b16 %v147
    %v527 = vunpack.c.l.b16 %v148
    %v528 = vunpack.c.h.b16 %v148
    %v529 = vunpack.c.l.b16 %v149
    %v530 = vunpack.c.h.b16 %v149
    %v531 = vunpack.c.l.b16 %v150
    %v532 = vunpack.c.h.b16 %v150
    %v533 = vunpack.c.l.b16 %v151
    %v534 = vunpack.c.h.b16 %v151
    %v535 = vunpack.c.l.b16 %v152
    %v536 = vunpack.c.h.b16 %v152
    %v537 = vunpack.c.l.b16 %v153
    %v538 = vunpack.c.h.b16 %v153
    %v539 = vunpack.c.l.b16 %v154
    %v540 = vunpack.c.h.b16 %v154
    %v541 = vunpack.c.l.b16 %v155
    %v542 = vunpack.c.h.b16 %v155
    %v543 = vunpack.c.l.b16 %v156
    %v544 = vunpack.c.h.b16 %v156
    %v545 = vunpack.c.l.b16 %v157
    %v546 = vunpack.c.h.b16 %v157
    %v547 = vunpack.c.l.b16 %v158
    %v548 = vunpack.c.h.b16 %v158
    %v549 = vunpack.c.l.b16 %v159
    %v550 = vunpack.c.h.b16 %v159
    %v551 = vunpack.c.l.b16 %v160
    %v552 = vunpack.c.h.b16 %v160
    %v553 = vunpack.c.l.b16 %v161
    %v554 = vunpack.c.h.b16 %v161
    %v555 = vunpack.c.l.b16 %v162
    %v556 = vunpack.c.h.b16 %v162
    %v557 = vunpack.c.l.b16 %v163
    %v558 = vunpack.c.h.b16 %v163
    %v559 = vunpack.c.l.b16 %v164
    %v560 = vunpack.c.h.b16 %v164
    %v561 = vunpack.c.l.b16 %v165
    %v562 = vunpack.c.h.b16 %v165
    %v563 = vunpack.c.l.b16 %v166
    %v564 = vunpack.c.h.b16 %v166
    %v565 = vunpack.c.l.b16 %v167
    %v566 = vunpack.c.h.b16 %v167
    %v567 = vunpack.c.l.b16 %v168
    %v568 = vunpack.c.h.b16 %v168
    %v569 = vunpack.c.l.b16 %v169
    %v570 = vunpack.c.h.b16 %v169
    %v571 = vunpack.c.l.b16 %v170
    %v572 = vunpack.c.h.b16 %v170
    %v573 = vpack.c.b16 %v319, %v317
    %v574 = vpack.c.b16 %v320, %v318
    %v575 = vpack.c.b16 %v323, %v321
    %v576 = vpack.c.b16 %v324, %v322
    %v577 = vpack.c.b16 %v327, %v325
    %v578 = vpack.c.b16 %v328, %v326
    %v579 = vpack.c.b16 %v331, %v329
    %v580 = vpack.c.b16 %v332, %v330
    %v581 = vpack.c.b16 %v335, %v333
    %v582 = vpack.c.b16 %v336, %v334
    %v583 = vpack.c.b16 %v339, %v337
    %v584 = vpack.c.b16 %v340, %v338
    %v585 = vpack.c.b16 %v343, %v341
    %v586 = vpack.c.b16 %v344, %v342
    %v587 = vpack.c.b16 %v347, %v345
    %v588 = vpack.c.b16 %v348, %v346
    %v589 = vpack.c.b16 %v351, %v349
    %v590 = vpack.c.b16 %v352, %v350
    %v591 = vpack.c.b16 %v355, %v353
    %v592 = vpack.c.b16 %v356, %v354
    %v593 = vpack.c.b16 %v359, %v357
    %v594 = vpack.c.b16 %v360, %v358
    %v595 = vpack.c.b16 %v363, %v361
    %v596 = vpack.c.b16 %v364, %v362
    %v597 = vpack.c.b16 %v367, %v365
    %v598 = vpack.c.b16 %v368, %v366
    %v599 = vpack.c.b16 %v371, %v369
    %v600 = vpack.c.b16 %v372, %v370
    %v601 = vpack.c.b16 %v375, %v373
    %v602 = vpack.c.b16 %v376, %v374
    %v603 = vpack.c.b16 %v379, %v377
    %v604 = vpack.c.b16 %v380, %v378
    %v605 = vpack.c.b16 %v383, %v381
    %v606 = vpack.c.b16 %v384, %v382
    %v607 = vpack.c.b16 %v387, %v385
    %v608 = vpack.c.b16 %v388, %v386
    %v609 = vpack.c.b16 %v391, %v389
    %v610 = vpack.c.b16 %v392, %v390
    %v611 = vpack.c.b16 %v395, %v393
    %v612 = vpack.c.b16 %v396, %v394
    %v613 = vpack.c.b16 %v399, %v397
    %v614 = vpack.c.b16 %v400, %v398
    %v615 = vpack.c.b16 %v403, %v401
    %v616 = vpack.c.b16 %v404, %v402
    %v617 = vpack.c.b16 %v407, %v405
    %v618 = vpack.c.b16 %v408, %v406
    %v619 = vpack.c.b16 %v411, %v409
    %v620 = vpack.c.b16 %v412, %v410
    %v621 = vpack.c.b16 %v415, %v413
    %v622 = vpack.c.b16 %v416, %v414
    %v623 = vpack.c.b16 %v419, %v417
    %v624 = vpack.c.b16 %v420, %v418
    %v625 = vpack.c.b16 %v423, %v421
    %v626 = vpack.c.b16 %v424, %v422
    %v627 = vpack.c.b16 %v427, %v425
    %v628 = vpack.c.b16 %v428, %v426
    %v629 = vpack.c.b16 %v431, %v429
    %v630 = vpack.c.b16 %v432, %v430
    %v631 = vpack.c.b16 %v435, %v433
    %v632 = vpack.c.b16 %v436, %v434
    %v633 = vpack.c.b16 %v439, %v437
    %v634 = vpack.c.b16 %v440, %v438
    %v635 = vpack.c.b16 %v443, %v441
    %v636 = vpack.c.b16 %v444, %v442
    %v637 = vpack.c.b16 %v447, %v445
    %v638 = vpack.c.b16 %v448, %v446
    %v639 = vpack.c.b16 %v451, %v449
    %v640 = vpack.c.b16 %v452, %v450
    %v641 = vpack.c.b16 %v455, %v453
    %v642 = vpack.c.b16 %v456, %v454
    %v643 = vpack.c.b16 %v459, %v457
    %v644 = vpack.c.b16 %v460, %v458
    %v645 = vpack.c.b16 %v463, %v461
    %v646 = vpack.c.b16 %v464, %v462
    %v647 = vpack.c.b16 %v467, %v465
    %v648 = vpack.c.b16 %v468, %v466
    %v649 = vpack.c.b16 %v471, %v469
    %v650 = vpack.c.b16 %v472, %v470
    %v651 = vpack.c.b16 %v475, %v473
    %v652 = vpack.c.b16 %v476, %v474
    %v653 = vpack.c.b16 %v479, %v477
    %v654 = vpack.c.b16 %v480, %v478
    %v655 = vpack.c.b16 %v483, %v481
    %v656 = vpack.c.b16 %v484, %v482
    %v657 = vpack.c.b16 %v487, %v485
    %v658 = vpack.c.b16 %v488, %v486
    %v659 = vpack.c.b16 %v491, %v489
    %v660 = vpack.c.b16 %v492, %v490
    %v661 = vpack.c.b16 %v495, %v493
    %v662 = vpack.c.b16 %v496, %v494
    %v663 = vpack.c.b16 %v499, %v497
    %v664 = vpack.c.b16 %v500, %v498
    %v665 = vpack.c.b16 %v503, %v501
    %v666 = vpack.c.b16 %v504, %v502
    %v667 = vpack.c.b16 %v507, %v505
    %v668 = vpack.c.b16 %v508, %v506
    %v669 = vpack.c.b16 %v511, %v509
    %v670 = vpack.c.b16 %v512, %v510
    %v671 = vpack.c.b16 %v515, %v513
    %v672 = vpack.c.b16 %v516, %v514
    %v673 = vpack.c.b16 %v519, %v517
    %v674 = vpack.c.b16 %v520, %v518
    %v675 = vpack.c.b16 %v523, %v521
    %v676 = vpack.c.b16 %v524, %v522
    %v677 = vpack.c.b16 %v527, %v525
    %v678 = vpack.c.b16 %v528, %v526
    %v679 = vpack.c.b16 %v531, %v529
    %v680 = vpack.c.b16 %v532, %v530
    %v681 = vpack.c.b16 %v535, %v533
    %v682 = vpack.c.b16 %v536, %v534
    %v683 = vpack.c.b16 %v539, %v537
    %v684 = vpack.c.b16 %v540, %v538
    %v685 = vpack.c.b16 %v543, %v541
    %v686 = vpack.c.b16 %v544, %v542
    %v687 = vpack.c.b16 %v547, %v545
    %v688 = vpack.c.b16 %v548, %v546
    %v689 = vpack.c.b16 %v551, %v549
    %v690 = vpack.c.b16 %v552, %v550
    %v691 = vpack.c.b16 %v555, %v553
    %v692 = vpack.c.b16 %v556, %v554
    %v693 = vpack.c.b16 %v559, %v557
    %v694 = vpack.c.b16 %v560, %v558
    %v695 = vpack.c.b16 %v563, %v561
    %v696 = vpack.c.b16 %v564, %v562
    %v697 = vpack.c.b16 %v567, %v565
    %v698 = vpack.c.b16 %v568, %v566
    %v699 = vpack.c.b16 %v571, %v569
    %v700 = vpack.c.b16 %v572, %v570
    %829 = vmatpush.bf16.msra.mxu0 %v587
    %830 = vmatpush.bf16.msra.mxu0 %v585
    %831 = vmatpush.bf16.msra.mxu0 %v583
    %832 = vmatpush.bf16.msra.mxu0 %v581
    %833 = vmatpush.bf16.msra.mxu0 %v579
    %834 = vmatpush.bf16.msra.mxu0 %v577
    %835 = vmatpush.bf16.msra.mxu0 %v575
    %836 = vmatpush.bf16.msra.mxu0 %v573
    %837 = vmatmul.bf16.gmra.mxu0 %v173
    %v838 = vpop.f32.mrf.mxu0
    %v839 = vadd.f32 0.0, %v838
    %v840 = vpop.f32.mrf.mxu0
    %841 = vdwg.mxu0
    %842 = vmatpush.bf16.msra.mxu0 %v603
    %843 = vmatpush.bf16.msra.mxu0 %v601
    %844 = vmatpush.bf16.msra.mxu0 %v599
    %845 = vmatpush.bf16.msra.mxu0 %v597
    %846 = vmatpush.bf16.msra.mxu0 %v595
    %847 = vmatpush.bf16.msra.mxu0 %v593
    %848 = vmatpush.bf16.msra.mxu0 %v591
    %849 = vmatpush.bf16.msra.mxu0 %v589
    %850 = vmatmul.bf16.gmra.mxu0 %v174
    %v851 = vpop.f32.mrf.mxu0
    %v852 = vadd.f32 %v839, %v851
    %v853 = vpop.f32.mrf.mxu0
    %854 = vdwg.mxu0
    %855 = vmatpush.bf16.msra.mxu0 %v619
    %856 = vmatpush.bf16.msra.mxu0 %v617
    %857 = vmatpush.bf16.msra.mxu0 %v615
    %858 = vmatpush.bf16.msra.mxu0 %v613
    %859 = vmatpush.bf16.msra.mxu0 %v611
    %860 = vmatpush.bf16.msra.mxu0 %v609
    %861 = vmatpush.bf16.msra.mxu0 %v607
    %862 = vmatpush.bf16.msra.mxu0 %v605
    %863 = vmatmul.bf16.gmra.mxu0 %v175
    %v864 = vpop.f32.mrf.mxu0
    %v865 = vadd.f32 %v852, %v864
    %v866 = vpop.f32.mrf.mxu0
    %867 = vdwg.mxu0
    %868 = vmatpush.bf16.msra.mxu0 %v635
    %869 = vmatpush.bf16.msra.mxu0 %v633
    %870 = vmatpush.bf16.msra.mxu0 %v631
    %871 = vmatpush.bf16.msra.mxu0 %v629
    %872 = vmatpush.bf16.msra.mxu0 %v627
    %873 = vmatpush.bf16.msra.mxu0 %v625
    %874 = vmatpush.bf16.msra.mxu0 %v623
    %875 = vmatpush.bf16.msra.mxu0 %v621
    %876 = vmatmul.bf16.gmra.mxu0 %v176
    %v877 = vpop.f32.mrf.mxu0
    %v878 = vadd.f32 %v865, %v877
    %v879 = vpop.f32.mrf.mxu0
    %880 = vdwg.mxu0
    %881 = vmatpush.bf16.msra.mxu0 %v651
    %882 = vmatpush.bf16.msra.mxu0 %v649
    %883 = vmatpush.bf16.msra.mxu0 %v647
    %884 = vmatpush.bf16.msra.mxu0 %v645
    %885 = vmatpush.bf16.msra.mxu0 %v643
    %886 = vmatpush.bf16.msra.mxu0 %v641
    %887 = vmatpush.bf16.msra.mxu0 %v639
    %888 = vmatpush.bf16.msra.mxu0 %v637
    %889 = vmatmul.bf16.gmra.mxu0 %v177
    %v890 = vpop.f32.mrf.mxu0
    %v891 = vadd.f32 %v878, %v890
    %v892 = vpop.f32.mrf.mxu0
    %893 = vdwg.mxu0
    %894 = vmatpush.bf16.msra.mxu0 %v667
    %895 = vmatpush.bf16.msra.mxu0 %v665
    %896 = vmatpush.bf16.msra.mxu0 %v663
    %897 = vmatpush.bf16.msra.mxu0 %v661
    %898 = vmatpush.bf16.msra.mxu0 %v659
    %899 = vmatpush.bf16.msra.mxu0 %v657
    %900 = vmatpush.bf16.msra.mxu0 %v655
    %901 = vmatpush.bf16.msra.mxu0 %v653
    %902 = vmatmul.bf16.gmra.mxu0 %v178
    %v903 = vpop.f32.mrf.mxu0
    %v904 = vadd.f32 %v891, %v903
    %v905 = vpop.f32.mrf.mxu0
    %906 = vdwg.mxu0
    %907 = vmatpush.bf16.msra.mxu0 %v683
    %908 = vmatpush.bf16.msra.mxu0 %v681
    %909 = vmatpush.bf16.msra.mxu0 %v679
    %910 = vmatpush.bf16.msra.mxu0 %v677
    %911 = vmatpush.bf16.msra.mxu0 %v675
    %912 = vmatpush.bf16.msra.mxu0 %v673
    %913 = vmatpush.bf16.msra.mxu0 %v671
    %914 = vmatpush.bf16.msra.mxu0 %v669
    %915 = vmatmul.bf16.gmra.mxu0 %v179
    %v916 = vpop.f32.mrf.mxu0
    %v917 = vadd.f32 %v904, %v916
    %v918 = vpop.f32.mrf.mxu0
    %919 = vdwg.mxu0
    %920 = vmatpush.bf16.msra.mxu0 %v699
    %921 = vmatpush.bf16.msra.mxu0 %v697
    %922 = vmatpush.bf16.msra.mxu0 %v695
    %923 = vmatpush.bf16.msra.mxu0 %v693
    %924 = vmatpush.bf16.msra.mxu0 %v691
    %925 = vmatpush.bf16.msra.mxu0 %v689
    %926 = vmatpush.bf16.msra.mxu0 %v687
    %927 = vmatpush.bf16.msra.mxu0 %v685
    %928 = vmatmul.bf16.gmra.mxu0 %v180
    %v929 = vpop.f32.mrf.mxu0
    %v930 = vadd.f32 %v917, %v929
    %v931 = vpop.f32.mrf.mxu0
    %932 = vdwg.mxu0
    %933 = vmatpush.bf16.msra.mxu0 %v588
    %934 = vmatpush.bf16.msra.mxu0 %v586
    %935 = vmatpush.bf16.msra.mxu0 %v584
    %936 = vmatpush.bf16.msra.mxu0 %v582
    %937 = vmatpush.bf16.msra.mxu0 %v580
    %938 = vmatpush.bf16.msra.mxu0 %v578
    %939 = vmatpush.bf16.msra.mxu0 %v576
    %940 = vmatpush.bf16.msra.mxu0 %v574
    %941 = vmatmul.bf16.gmra.mxu0 %v173
    %v942 = vpop.f32.mrf.mxu0
    %v943 = vadd.f32 0.0, %v942
    %v944 = vpop.f32.mrf.mxu0
    %945 = vdwg.mxu0
    %946 = vmatpush.bf16.msra.mxu0 %v604
    %947 = vmatpush.bf16.msra.mxu0 %v602
    %948 = vmatpush.bf16.msra.mxu0 %v600
    %949 = vmatpush.bf16.msra.mxu0 %v598
    %950 = vmatpush.bf16.msra.mxu0 %v596
    %951 = vmatpush.bf16.msra.mxu0 %v594
    %952 = vmatpush.bf16.msra.mxu0 %v592
    %953 = vmatpush.bf16.msra.mxu0 %v590
    %954 = vmatmul.bf16.gmra.mxu0 %v174
    %v955 = vpop.f32.mrf.mxu0
    %v956 = vadd.f32 %v943, %v955
    %v957 = vpop.f32.mrf.mxu0
    %958 = vdwg.mxu0
    %959 = vmatpush.bf16.msra.mxu0 %v620
    %960 = vmatpush.bf16.msra.mxu0 %v618
    %961 = vmatpush.bf16.msra.mxu0 %v616
    %962 = vmatpush.bf16.msra.mxu0 %v614
    %963 = vmatpush.bf16.msra.mxu0 %v612
    %964 = vmatpush.bf16.msra.mxu0 %v610
    %965 = vmatpush.bf16.msra.mxu0 %v608
    %966 = vmatpush.bf16.msra.mxu0 %v606
    %967 = vmatmul.bf16.gmra.mxu0 %v175
    %v968 = vpop.f32.mrf.mxu0
    %v969 = vadd.f32 %v956, %v968
    %v970 = vpop.f32.mrf.mxu0
    %971 = vdwg.mxu0
    %972 = vmatpush.bf16.msra.mxu0 %v636
    %973 = vmatpush.bf16.msra.mxu0 %v634
    %974 = vmatpush.bf16.msra.mxu0 %v632
    %975 = vmatpush.bf16.msra.mxu0 %v630
    %976 = vmatpush.bf16.msra.mxu0 %v628
    %977 = vmatpush.bf16.msra.mxu0 %v626
    %978 = vmatpush.bf16.msra.mxu0 %v624
    %979 = vmatpush.bf16.msra.mxu0 %v622
    %980 = vmatmul.bf16.gmra.mxu0 %v176
    %v981 = vpop.f32.mrf.mxu0
    %v982 = vadd.f32 %v969, %v981
    %v983 = vpop.f32.mrf.mxu0
    %984 = vdwg.mxu0
    %985 = vmatpush.bf16.msra.mxu0 %v652
    %986 = vmatpush.bf16.msra.mxu0 %v650
    %987 = vmatpush.bf16.msra.mxu0 %v648
    %988 = vmatpush.bf16.msra.mxu0 %v646
    %989 = vmatpush.bf16.msra.mxu0 %v644
    %990 = vmatpush.bf16.msra.mxu0 %v642
    %991 = vmatpush.bf16.msra.mxu0 %v640
    %992 = vmatpush.bf16.msra.mxu0 %v638
    %993 = vmatmul.bf16.gmra.mxu0 %v177
    %v994 = vpop.f32.mrf.mxu0
    %v995 = vadd.f32 %v982, %v994
    %v996 = vpop.f32.mrf.mxu0
    %997 = vdwg.mxu0
    %998 = vmatpush.bf16.msra.mxu0 %v668
    %999 = vmatpush.bf16.msra.mxu0 %v666
    %1000 = vmatpush.bf16.msra.mxu0 %v664
    %1001 = vmatpush.bf16.msra.mxu0 %v662
    %1002 = vmatpush.bf16.msra.mxu0 %v660
    %1003 = vmatpush.bf16.msra.mxu0 %v658
    %1004 = vmatpush.bf16.msra.mxu0 %v656
    %1005 = vmatpush.bf16.msra.mxu0 %v654
    %1006 = vmatmul.bf16.gmra.mxu0 %v178
    %v1007 = vpop.f32.mrf.mxu0
    %v1008 = vadd.f32 %v995, %v1007
    %v1009 = vpop.f32.mrf.mxu0
    %1010 = vdwg.mxu0
    %1011 = vmatpush.bf16.msra.mxu0 %v684
    %1012 = vmatpush.bf16.msra.mxu0 %v682
    %1013 = vmatpush.bf16.msra.mxu0 %v680
    %1014 = vmatpush.bf16.msra.mxu0 %v678
    %1015 = vmatpush.bf16.msra.mxu0 %v676
    %1016 = vmatpush.bf16.msra.mxu0 %v674
    %1017 = vmatpush.bf16.msra.mxu0 %v672
    %1018 = vmatpush.bf16.msra.mxu0 %v670
    %1019 = vmatmul.bf16.gmra.mxu0 %v179
    %v1020 = vpop.f32.mrf.mxu0
    %v1021 = vadd.f32 %v1008, %v1020
    %v1022 = vpop.f32.mrf.mxu0
    %1023 = vdwg.mxu0
    %1024 = vmatpush.bf16.msra.mxu0 %v700
    %1025 = vmatpush.bf16.msra.mxu0 %v698
    %1026 = vmatpush.bf16.msra.mxu0 %v696
    %1027 = vmatpush.bf16.msra.mxu0 %v694
    %1028 = vmatpush.bf16.msra.mxu0 %v692
    %1029 = vmatpush.bf16.msra.mxu0 %v690
    %1030 = vmatpush.bf16.msra.mxu0 %v688
    %1031 = vmatpush.bf16.msra.mxu0 %v686
    %1032 = vmatmul.bf16.gmra.mxu0 %v180
    %v1033 = vpop.f32.mrf.mxu0
    %v1034 = vadd.f32 %v1021, %v1033
    %v1035 = vpop.f32.mrf.mxu0
    %1036 = vdwg.mxu0
    %p1037 = scmp.eq.s32.totalorder 0, 0
    // Predicated region
    $region18: #{tpu_custom_call.1} parent=1 // pred_check
      %p1038 = pneg %p1037
    $region19: #{tpu_custom_call.1} parent=1 // pred_check_branch
      %1040 = sbr.rel (%p1038) target = $region21
    $region20: #{tpu_custom_call.1} parent=1 // pred_region
      %v1043 = vrot.slane %v1034, 6
      %vm1044 = vcmask 1041408
      %v1045 = vsel %vm1044, %v930, %v1043
      %1047 = vst [vmem:[#allocation7] sm:$0xf] %v1045
    $region21: #{tpu_custom_call.1} parent=1 // pred_fallthru
      _
    %p1048 = scmp.gt.s32.totalorder 0, 0
    // Predicated region
    $region22: #{tpu_custom_call.1} parent=1 // pred_check
      %p1049 = pneg %p1048
    $region23: #{tpu_custom_call.1} parent=1 // pred_check_branch
      %1051 = sbr.rel (%p1049) target = $region25
    $region24: #{tpu_custom_call.1} parent=1 // pred_region
      %v1052 = vld [vmem:[#allocation7] sm:$0xf]
      %v1055 = vrot.slane %v1034, 6
      %vm1056 = vcmask 1041408
      %v1057 = vsel %vm1056, %v930, %v1055
      %v1059 = vadd.f32 %v1052, %v1057
      %1060 = vst [vmem:[#allocation7] sm:$0xf] %v1059
    $region25: #{tpu_custom_call.1} parent=1 // pred_fallthru
      _
    // Predicated region
    $region26: #{tpu_custom_call.1} parent=1 // pred_check
      _
    $region27: #{tpu_custom_call.1} parent=1 // pred_check_branch
      %1062 = sbr.rel (0) target = $region29
    $region28: #{tpu_custom_call.1} parent=1 // pred_region
      %1064 = vsyncadd [#allocation4], 0
      %s1066 = sshll.u32 [#allocation7], 4
      %s1067 = int_to_ptr.vmem [resolvable:$true] %s1066
      %s1068 = sshll.u32 %s2, 4
      %s1069 = int_to_ptr.hbm [resolvable:$true] %s1068
      %1071 = dma.vmem_to_hbm [thread:$0]  %s1067, 64, %s1069, [#allocation4]
    $region29: #{tpu_custom_call.1} parent=1 // pred_fallthru
      _
    // Predicated region
    $region30: #{tpu_custom_call.1} parent=1 // pred_check
      _
    $region31: #{tpu_custom_call.1} parent=1 // pred_check_branch
      %1073 = sbr.rel (0) target = $region33
    $region32: #{tpu_custom_call.1} parent=1 // pred_region
      %1075 = dma.done [#allocation4], 64
    $region33: #{tpu_custom_call.1} parent=1 // pred_fallthru
      _
    %1076 = vsyncpa [#allocation3], 1
    %1077 = vsyncpa [#allocation6], 1
    %1078 = vsyncpa [#allocation4], 1

</llo_original>
